<compile_context>
chip_gen: v7x
topology: tpu7x:2x2x1
jax: 0.10.0
libtpu: 0.0.40
codegen_flags: <defaults>
</compile_context>

<pallas_src>
import jax
import jax.numpy as jnp
from jax.experimental import pallas as pl
from jax.experimental.pallas import tpu as pltpu

_LANE = 128
_SUBLANE = 8


def _round_up(n, m):
    return (n + m - 1) // m * m


def _glow_mlp_kernel(x_ref, w1_ref, b1_ref, w2_ref, b2_ref, o_ref):
    """Per batch tile: out = relu(x @ w1 + b1) @ w2 + b2   (BN already folded).

    x arrives in its native dtype and is cast to the MXU dtype on the VPU here,
    avoiding an extra HBM read+write of a padded/cast copy of x.
    """
    x = x_ref[...].astype(w1_ref.dtype)
    z = jnp.dot(x, w1_ref[...], preferred_element_type=jnp.float32)
    z = jnp.maximum(z + b1_ref[...], 0.0)                       # f32 bias + ReLU (VPU)
    y = jnp.dot(z.astype(w2_ref.dtype), w2_ref[...],
                preferred_element_type=jnp.float32)
    o_ref[...] = (y + b2_ref[...]).astype(o_ref.dtype)


def _glow_block_xla(x, gamma, beta, w1, b1, w2, b2):
    """Fused XLA fallback for tiny feature dims (D, H < 128)."""
    xf = x.astype(jnp.float32)
    mean = jnp.mean(xf, axis=0)
    var = jnp.mean(jnp.square(xf - mean), axis=0)
    xn = (xf - mean) * jax.lax.rsqrt(var + 1e-5) * gamma + beta
    z = jnp.maximum(xn @ w1 + b1, 0.0)
    return (z @ w2 + b2).astype(x.dtype)


def glow_block(x, gamma, beta, w1, b1, w2, b2, *,
               mxu_dtype=jnp.bfloat16, tile_b=512, use_pallas=None):
    """GlowBlock forward.  x: (B, D); w1: (D, H), w2: (H, D) (pre-transposed to
    (in, out)); gamma/beta BN affine params; b1/b2 linear biases.  Returns (B, D)
    in x.dtype.  mxu_dtype=jnp.float32 gives a full-precision escape hatch."""
    B, D = x.shape
    H = w1.shape[1]

    gamma = gamma.reshape(-1).astype(jnp.float32)
    beta = beta.reshape(-1).astype(jnp.float32)
    b1 = b1.reshape(-1).astype(jnp.float32)
    b2 = b2.reshape(-1).astype(jnp.float32)
    w1 = w1.astype(jnp.float32)
    w2 = w2.astype(jnp.float32)

    if use_pallas is None:
        # Padding tiny feature dims to 128 lanes inflates matmul work and HBM
        # bytes enormously; XLA fuses this trivially, so only use the kernel at
        # lane scale.
        use_pallas = (D >= _LANE and H >= _LANE)
    if not use_pallas:
        return _glow_block_xla(x, gamma, beta, w1, b1, w2, b2)

    # --- BatchNorm1d training-mode stats over the FULL batch (hoisted out of the
    # tiled kernel so per-tile statistics can never occur). ---
    xf = x.astype(jnp.float32)
    mean = jnp.mean(xf, axis=0)
    var = jnp.mean(jnp.square(xf - mean), axis=0)            # biased variance
    scale = gamma * jax.lax.rsqrt(var + 1e-5)                # (D,)
    shift = beta - mean * scale                              # (D,)
    # TODO(synk): running-stat update / eval-mode BN not modeled (matches a fresh
    # nn.BatchNorm1d in training mode only).

    # --- Fold BN into linear1 (row-scale of W1 + adjusted bias), once per call. ---
    w1f = scale[:, None] * w1                                # (D, H)
    b1f = shift @ w1 + b1                                    # (H,)

    # --- Pad ONLY the hidden dim of the (small) weights to a lane multiple; x and
    # the output stay unpadded in HBM (Mosaic pads partial lanes in VMEM). ---
    Hp = _round_up(H, _LANE)
    if Hp == H:
        w1_p = w1f.astype(mxu_dtype)
        w2_p = w2.astype(mxu_dtype)
        b1_p = b1f.reshape(1, H)
    else:
        w1_p = jnp.zeros((D, Hp), mxu_dtype).at[:, :H].set(w1f.astype(mxu_dtype))
        w2_p = jnp.zeros((Hp, D), mxu_dtype).at[:H, :].set(w2.astype(mxu_dtype))
        b1_p = jnp.zeros((1, Hp), jnp.float32).at[0, :H].set(b1f)
    b2_p = b2.reshape(1, D)

    # --- Batch tiling: 1-D "parallel" grid streaming x/out; keep >= 2 grid steps
    # whenever B allows so both v7x TensorCores get work. ---
    if B >= 2 * _SUBLANE:
        tb = min(tile_b, _round_up((B + 1) // 2, _SUBLANE))
    else:
        tb = _round_up(max(B, 1), _SUBLANE)
    grid = (pl.cdiv(B, tb),)

    # --- VMEM budget: per-generation capacity minus headroom (no flat 64 MiB cap),
    # counting double buffers for streamed operands and single buffers for weights. ---
    mxu_isz = jnp.dtype(mxu_dtype).itemsize
    x_isz = x.dtype.itemsize
    Dl = _round_up(D, _LANE)                                 # in-VMEM lane padding
    needed = (2 * tb * Dl * x_isz                            # x tiles (double-buffered)
              + 2 * tb * Dl * x_isz                          # out tiles (double-buffered)
              + _round_up(D, _SUBLANE) * Hp * mxu_isz        # w1 (single-buffered)
              + Hp * Dl * mxu_isz                            # w2 (single-buffered)
              + (Hp + Dl) * 4                                # biases
              + tb * Hp * 4 + tb * Hp * mxu_isz              # z (f32) + z cast for matmul2
              + tb * Dl * (4 + mxu_isz))                     # y accumulator + x cast
    try:
        vmem_cap = int(pltpu.get_tpu_info().vmem_capacity_bytes)
    except Exception:
        vmem_cap = 64 << 20
    vmem_limit = int(max(min(2 * needed, vmem_cap - (8 << 20)), 16 << 20))
    # TODO(synk): weights that exceed the VMEM budget (v7x 64 MiB) would need a
    # second "arbitrary" grid axis streaming W1 column- / W2 row-chunks with an
    # f32 accumulator; not implemented here.

    cost = pl.CostEstimate(
        flops=4 * B * D * Hp,
        transcendentals=0,
        bytes_accessed=int(B * D * (2 * x_isz) + (D * Hp + Hp * D) * mxu_isz),
    )

    return pl.pallas_call(
        _glow_mlp_kernel,
        out_shape=jax.ShapeDtypeStruct((B, D), x.dtype),
        grid=grid,
        in_specs=[
            pl.BlockSpec((tb, D), lambda i: (i, 0)),                      # x: streamed
            pl.BlockSpec((D, Hp), lambda i: (0, 0),
                         pipeline_mode=pl.Buffered(1)),                   # w1 resident
            pl.BlockSpec((1, Hp), lambda i: (0, 0),
                         pipeline_mode=pl.Buffered(1)),                   # b1 resident
            pl.BlockSpec((Hp, D), lambda i: (0, 0),
                         pipeline_mode=pl.Buffered(1)),                   # w2 resident
            pl.BlockSpec((1, D), lambda i: (0, 0),
                         pipeline_mode=pl.Buffered(1)),                   # b2 resident
        ],
        out_specs=pl.BlockSpec((tb, D), lambda i: (i, 0)),
        compiler_params=pltpu.CompilerParams(
            dimension_semantics=("parallel",),
            vmem_limit_bytes=vmem_limit,
        ),
        cost_estimate=cost,
    )(x, w1_p, b1_p, w2_p, b2_p)


def reference_glow_block(x, gamma, beta, w1, b1, w2, b2):
    x = x.astype(jnp.float32)
    mean = jnp.mean(x, axis=0, keepdims=True)
    var = jnp.mean((x - mean) ** 2, axis=0, keepdims=True)
    x_bn = (x - mean) / jnp.sqrt(var + 1e-5) * gamma.reshape(1, -1) + beta.reshape(1, -1)
    z = jnp.maximum(x_bn @ w1 + b1.reshape(1, -1), 0.0)
    return z @ w2 + b2.reshape(1, -1)


if __name__ == "__main__":
    key = jax.random.PRNGKey(0)

    def make_case(k, B, D, H):
        kx, kg, kb, k1, k2, k3, k4 = jax.random.split(k, 7)
        x = jax.random.normal(kx, (B, D), dtype=jnp.float32)
        gamma = 1.0 + 0.1 * jax.random.normal(kg, (D,), dtype=jnp.float32)
        beta = 0.1 * jax.random.normal(kb, (D,), dtype=jnp.float32)
        lim1 = 1.0 / (D ** 0.5)
        w1 = jax.random.uniform(k1, (D, H), jnp.float32, -lim1, lim1)   # (in, out) = W1.T
        b1 = jax.random.uniform(k2, (H,), jnp.float32, -lim1, lim1)
        lim2 = 1.0 / (H ** 0.5)
        w2 = jax.random.uniform(k3, (H, D), jnp.float32, -lim2, lim2)   # (in, out) = W2.T
        b2 = jax.random.uniform(k4, (D,), jnp.float32, -lim2, lim2)
        return x, gamma, beta, w1, b1, w2, b2

    key1, key2 = jax.random.split(key)

    # --- Case 1: module-sized toy shapes (B=8, D=16, H=32). ---
    args = make_case(key1, 8, 16, 32)
    ref = reference_glow_block(*args)

    out_auto = jax.block_until_ready(glow_block(*args))              # auto -> XLA fallback
    assert out_auto.shape == (8, 16)
    assert jnp.allclose(out_auto, ref, atol=1e-5, rtol=1e-5), "XLA fallback mismatch"

    out_f32 = jax.block_until_ready(
        glow_block(*args, mxu_dtype=jnp.float32, use_pallas=True))    # force Pallas, f32 MXU
    assert out_f32.shape == (8, 16)
    assert jnp.allclose(out_f32, ref, atol=1e-4, rtol=1e-4), "Pallas f32 mismatch"

    out_bf16 = jax.block_until_ready(glow_block(*args, use_pallas=True))
    assert jnp.allclose(out_bf16, ref, atol=5e-2, rtol=5e-2), "Pallas bf16 mismatch"

    # --- Case 2: lane-aligned shapes (no padding, multi-step parallel grid). ---
    args2 = make_case(key2, 512, 128, 256)
    ref2 = reference_glow_block(*args2)

    out2_f32 = jax.block_until_ready(glow_block(*args2, mxu_dtype=jnp.float32))
    assert out2_f32.shape == (512, 128)
    assert jnp.allclose(out2_f32, ref2, atol=1e-3, rtol=1e-3), "Pallas f32 (large) mismatch"

    out2_bf16 = jax.block_until_ready(glow_block(*args2))             # auto -> Pallas, bf16
    assert jnp.allclose(out2_bf16, ref2, atol=5e-2, rtol=5e-2), "Pallas bf16 (large) mismatch"

    print("KERNEL_OK")
</pallas_src>

<mosaic_0001>
module attributes {stable_mosaic.version = 11 : i64} {
  func.func @_glow_mlp_kernel(%arg0: i32, %arg1: memref<8x16xf32, #tpu.memory_space<vmem>>, %arg2: memref<16x128xf32, #tpu.memory_space<vmem>>, %arg3: memref<1x128xf32, #tpu.memory_space<vmem>>, %arg4: memref<128x16xf32, #tpu.memory_space<vmem>>, %arg5: memref<1x16xf32, #tpu.memory_space<vmem>>, %arg6: memref<8x16xf32, #tpu.memory_space<vmem>>) attributes {dimension_semantics = [#tpu.dimension_semantics<parallel>], iteration_bounds = array<i64: 1>, scalar_prefetch = 0 : i64, scratch_operands = 0 : i64, tpu.core_type = #tpu.core_type<tc>, window_params = [{transform_indices = @transform_0, window_bounds = array<i64: 8, 16>}, {pipeline_mode = #tpu.pipeline_mode<synchronous>, transform_indices = @transform_1, window_bounds = array<i64: 16, 128>}, {pipeline_mode = #tpu.pipeline_mode<synchronous>, transform_indices = @transform_2, window_bounds = array<i64: 1, 128>}, {pipeline_mode = #tpu.pipeline_mode<synchronous>, transform_indices = @transform_3, window_bounds = array<i64: 128, 16>}, {pipeline_mode = #tpu.pipeline_mode<synchronous>, transform_indices = @transform_4, window_bounds = array<i64: 1, 16>}, {transform_indices = @transform_5, window_bounds = array<i64: 8, 16>}]} {
    %c0 = arith.constant 0 : index
    %c0_0 = arith.constant 0 : index
    %0 = vector.load %arg1[%c0, %c0_0] : memref<8x16xf32, #tpu.memory_space<vmem>>, vector<8x16xf32>
    %c0_1 = arith.constant 0 : index
    %c0_2 = arith.constant 0 : index
    %1 = vector.load %arg2[%c0_1, %c0_2] : memref<16x128xf32, #tpu.memory_space<vmem>>, vector<16x128xf32>
    %cst = arith.constant dense<0.000000e+00> : vector<8x128xf32>
    %2 = tpu.matmul %0, %1, %cst {dimension_numbers = #tpu.dot_dimension_numbers<[1], [0], [0], [1], [0, 0, 1, 1], [], []>} : vector<8x16xf32>, vector<16x128xf32>, vector<8x128xf32> -> vector<8x128xf32>
    %c0_3 = arith.constant 0 : index
    %c0_4 = arith.constant 0 : index
    %3 = vector.load %arg3[%c0_3, %c0_4] : memref<1x128xf32, #tpu.memory_space<vmem>>, vector<1x128xf32>
    %4 = vector.broadcast %3 : vector<1x128xf32> to vector<8x128xf32>
    %5 = arith.addf %2, %4 : vector<8x128xf32>
    %cst_5 = arith.constant 0.000000e+00 : f32
    %6 = vector.broadcast %cst_5 : f32 to vector<8x128xf32>
    %7 = arith.maximumf %5, %6 : vector<8x128xf32>
    %c0_6 = arith.constant 0 : index
    %c0_7 = arith.constant 0 : index
    %8 = vector.load %arg4[%c0_6, %c0_7] : memref<128x16xf32, #tpu.memory_space<vmem>>, vector<128x16xf32>
    %cst_8 = arith.constant dense<0.000000e+00> : vector<8x16xf32>
    %9 = tpu.matmul %7, %8, %cst_8 {dimension_numbers = #tpu.dot_dimension_numbers<[1], [0], [0], [1], [0, 0, 1, 1], [], []>} : vector<8x128xf32>, vector<128x16xf32>, vector<8x16xf32> -> vector<8x16xf32>
    %c0_9 = arith.constant 0 : index
    %c0_10 = arith.constant 0 : index
    %10 = vector.load %arg5[%c0_9, %c0_10] : memref<1x16xf32, #tpu.memory_space<vmem>>, vector<1x16xf32>
    %11 = vector.broadcast %10 : vector<1x16xf32> to vector<8x16xf32>
    %12 = arith.addf %9, %11 : vector<8x16xf32>
    %c0_11 = arith.constant 0 : index
    %c0_12 = arith.constant 0 : index
    %13 = vector.load %arg6[%c0_11, %c0_12] : memref<8x16xf32, #tpu.memory_space<vmem>>, vector<8x16xf32>
    tpu.vector_store %arg6[%c0_11, %c0_12], %12 {strides = array<i32>} : memref<8x16xf32, #tpu.memory_space<vmem>>, vector<8x16xf32>,
    return
  }
  func.func @transform_0(%arg0: i32) -> (i32, i32) {
    %c0_i32 = arith.constant 0 : i32
    %c0_i32_0 = arith.constant 0 : i32
    return %arg0, %c0_i32 : i32, i32
  }
  func.func @transform_1(%arg0: i32) -> (i32, i32) {
    %c0_i32 = arith.constant 0 : i32
    %c0_i32_0 = arith.constant 0 : i32
    %c0_i32_1 = arith.constant 0 : i32
    return %c0_i32, %c0_i32_0 : i32, i32
  }
  func.func @transform_2(%arg0: i32) -> (i32, i32) {
    %c0_i32 = arith.constant 0 : i32
    %c0_i32_0 = arith.constant 0 : i32
    %c0_i32_1 = arith.constant 0 : i32
    return %c0_i32, %c0_i32_0 : i32, i32
  }
  func.func @transform_3(%arg0: i32) -> (i32, i32) {
    %c0_i32 = arith.constant 0 : i32
    %c0_i32_0 = arith.constant 0 : i32
    %c0_i32_1 = arith.constant 0 : i32
    return %c0_i32, %c0_i32_0 : i32, i32
  }
  func.func @transform_4(%arg0: i32) -> (i32, i32) {
    %c0_i32 = arith.constant 0 : i32
    %c0_i32_0 = arith.constant 0 : i32
    %c0_i32_1 = arith.constant 0 : i32
    return %c0_i32, %c0_i32_0 : i32, i32
  }
  func.func @transform_5(%arg0: i32) -> (i32, i32) {
    %c0_i32 = arith.constant 0 : i32
    %c0_i32_0 = arith.constant 0 : i32
    return %arg0, %c0_i32 : i32, i32
  }
}

</mosaic_0001>

<llo_original>
// kernel: tpu_custom_call.1
$region0: #{tpu_custom_call.1}
  #allocation0 [shape = 'u32[]', space=smem, size = 0x4, offset = 0x4, fixed_abs, tag = 'smem constant byte address 0x4 - core index']
  #allocation1 [shape = 'u32[144,128]{1,0:T(1,128)}', space=vmem, size = 0x12000, scoped, tag = 'internal scratch']
  %s0 = inlined_call_operand.vmem [shape: f32[8,16], index: 0, kind: input, shape index: {}]
  %s1 = inlined_call_operand.vmem [shape: f32[16,128], index: 1, kind: input, shape index: {}]
  %s2 = inlined_call_operand.vmem [shape: f32[1,128], index: 2, kind: input, shape index: {}]
  %s3 = inlined_call_operand.vmem [shape: f32[128,16], index: 3, kind: input, shape index: {}]
  %s4 = inlined_call_operand.vmem [shape: f32[1,16], index: 4, kind: input, shape index: {}]
  %s5 = inlined_call_operand.hbm [shape: f32[8,16], index: 5, kind: output, shape index: {}]
  %s6 = sld [smem:[#allocation0]]
  $region30: #{tpu_custom_call.1} parent=0
    _
  %s8 = ssub.s32 1, %s6
  %s9 = scalar_select 0, %s8, %s6
  $region1: #{tpu_custom_call.1} parent=0
    #allocation2 [shape = 'u8[4096]{0}', space=vmem, size = 0x1000, scoped, tag = 'output window, operand 0, single buffered']
    #allocation3 [shape = 's32[1]{0}', space=sflag, size = 0x4, scoped, tag = 'scoped memory for tpu_custom_call.1']
    %10 = vsyncpa [#allocation3], 0
    // Predicated region
    $region2: #{tpu_custom_call.1} parent=1 // pred_check
      _
    $region3: #{tpu_custom_call.1} parent=1 // pred_check_branch
      %12 = sbr.rel (0) target = $region5
    $region4: #{tpu_custom_call.1} parent=1 // pred_region
      _
    $region5: #{tpu_custom_call.1} parent=1 // pred_fallthru
      _
    // Predicated region
    $region6: #{tpu_custom_call.1} parent=1 // pred_check
      _
    $region7: #{tpu_custom_call.1} parent=1 // pred_check_branch
      %14 = sbr.rel (0) target = $region9
    $region8: #{tpu_custom_call.1} parent=1 // pred_region
      _
    $region9: #{tpu_custom_call.1} parent=1 // pred_fallthru
      _
    // Predicated region
    $region10: #{tpu_custom_call.1} parent=1 // pred_check
      _
    $region11: #{tpu_custom_call.1} parent=1 // pred_check_branch
      %16 = sbr.rel (0) target = $region13
    $region12: #{tpu_custom_call.1} parent=1 // pred_region
      _
    $region13: #{tpu_custom_call.1} parent=1 // pred_fallthru
      _
    // Predicated region
    $region14: #{tpu_custom_call.1} parent=1 // pred_check
      _
    $region15: #{tpu_custom_call.1} parent=1 // pred_check_branch
      %18 = sbr.rel (0) target = $region17
    $region16: #{tpu_custom_call.1} parent=1 // pred_region
      _
    $region17: #{tpu_custom_call.1} parent=1 // pred_fallthru
      _
    // Predicated region
    $region18: #{tpu_custom_call.1} parent=1 // pred_check
      _
    $region19: #{tpu_custom_call.1} parent=1 // pred_check_branch
      %20 = sbr.rel (0) target = $region21
    $region20: #{tpu_custom_call.1} parent=1 // pred_region
      _
    $region21: #{tpu_custom_call.1} parent=1 // pred_fallthru
      _
    %v21 = vld [vmem:[%s0] sm:$0xff]
    %v22 = vld [vmem:[%s1] sm:$0xff]
    %v23 = vld [vmem:[%s1 + $0x8] sm:$0xff]
    %v24 = vld [vmem:[%s2] sm:$0x1]
    %v26 = vlaneseq
    %v27 = vshrl.u32 %v26, 7
    %v28 = vsub.s32 0, %v27
    %v29 = vrot.slane %v24, %v28
    %vm31 = vcmask 130048
    %v33 = vsel %vm31, %v21, 0
    %35 = vmatprep.subr.mxu0 0.0
    %36 = vmatpush1.msra.mxu0 %v22
    %37 = vmatprep.subr.mxu0 0.0
    %38 = vmatpush1.msra.mxu0 %v23
    %39 = vmatprep.subr.mxu0 0.0
    %40 = vmatpush1.msra.mxu0 0.0
    %41 = vmatprep.subr.mxu0 0.0
    %42 = vmatpush1.msra.mxu0 0.0
    %43 = vmatprep.subr.mxu0 0.0
    %44 = vmatpush1.msra.mxu0 0.0
    %45 = vmatprep.subr.mxu0 0.0
    %46 = vmatpush1.msra.mxu0 0.0
    %47 = vmatprep.subr.mxu0 0.0
    %48 = vmatpush1.msra.mxu0 0.0
    %49 = vmatprep.subr.mxu0 0.0
    %50 = vmatpush1.msra.mxu0 0.0
    %51 = vmatprep.subr.mxu0 0.0
    %52 = vmatpush1.msra.mxu0 0.0
    %53 = vmatprep.subr.mxu0 0.0
    %54 = vmatpush1.msra.mxu0 0.0
    %55 = vmatprep.subr.mxu0 0.0
    %56 = vmatpush1.msra.mxu0 0.0
    %57 = vmatprep.subr.mxu0 0.0
    %58 = vmatpush1.msra.mxu0 0.0
    %59 = vmatprep.subr.mxu0 0.0
    %60 = vmatpush1.msra.mxu0 0.0
    %61 = vmatprep.subr.mxu0 0.0
    %62 = vmatpush1.msra.mxu0 0.0
    %63 = vmatprep.subr.mxu0 0.0
    %64 = vmatpush1.msra.mxu0 0.0
    %65 = vmatprep.subr.mxu0 0.0
    %66 = vmatpush1.msra.mxu0 0.0
    %67 = vmatprep.subr.mxu0 0.0
    %68 = vmatpush1.msra.mxu0 0.0
    %69 = vmatprep.subr.mxu0 0.0
    %70 = vmatpush1.msra.mxu0 0.0
    %71 = vmatprep.subr.mxu0 0.0
    %72 = vmatpush1.msra.mxu0 0.0
    %73 = vmatprep.subr.mxu0 0.0
    %74 = vmatpush1.msra.mxu0 0.0
    %75 = vmatprep.subr.mxu0 0.0
    %76 = vmatpush1.msra.mxu0 0.0
    %77 = vmatprep.subr.mxu0 0.0
    %78 = vmatpush1.msra.mxu0 0.0
    %79 = vmatprep.subr.mxu0 0.0
    %80 = vmatpush1.msra.mxu0 0.0
    %81 = vmatprep.subr.mxu0 0.0
    %82 = vmatpush1.msra.mxu0 0.0
    %83 = vmatprep.subr.mxu0 0.0
    %84 = vmatpush1.msra.mxu0 0.0
    %85 = vmatprep.subr.mxu0 0.0
    %86 = vmatpush1.msra.mxu0 0.0
    %87 = vmatprep.subr.mxu0 0.0
    %88 = vmatpush1.msra.mxu0 0.0
    %89 = vmatprep.subr.mxu0 0.0
    %90 = vmatpush1.msra.mxu0 0.0
    %91 = vmatprep.subr.mxu0 0.0
    %92 = vmatpush1.msra.mxu0 0.0
    %93 = vmatprep.subr.mxu0 0.0
    %94 = vmatpush1.msra.mxu0 0.0
    %95 = vmatprep.subr.mxu0 0.0
    %96 = vmatpush1.msra.mxu0 0.0
    %97 = vmatprep.subr.mxu0 0.0
    %98 = vmatpush1.msra.mxu0 0.0
    %99 = vmatprep.mubr.f32.mxu0 0.0
    %100 = vmatmul.mubr.f32.gmra.mrb[0].mxu0 %v33
    %v101 = vpop.f32.mrb[0].mxu0
    %v102 = vadd.f32 %v29, %v101
    %v103 = vpop.f32.mrb[0].mxu0
    %104 = vdwg.mxu0
    %v105 = vmax.f32 %v102, 0.0
    %v106 = vld [vmem:[%s3] sm:$0xff]
    %v107 = vld [vmem:[%s3 + $0x8] sm:$0xff]
    %v108 = vld [vmem:[%s3 + $0x10] sm:$0xff]
    %v109 = vld [vmem:[%s3 + $0x18] sm:$0xff]
    %v110 = vld [vmem:[%s3 + $0x20] sm:$0xff]
    %v111 = vld [vmem:[%s3 + $0x28] sm:$0xff]
    %v112 = vld [vmem:[%s3 + $0x30] sm:$0xff]
    %v113 = vld [vmem:[%s3 + $0x38] sm:$0xff]
    %v114 = vld [vmem:[%s3 + $0x40] sm:$0xff]
    %v115 = vld [vmem:[%s3 + $0x48] sm:$0xff]
    %v116 = vld [vmem:[%s3 + $0x50] sm:$0xff]
    %v117 = vld [vmem:[%s3 + $0x58] sm:$0xff]
    %v118 = vld [vmem:[%s3 + $0x60] sm:$0xff]
    %v119 = vld [vmem:[%s3 + $0x68] sm:$0xff]
    %v120 = vld [vmem:[%s3 + $0x70] sm:$0xff]
    %v121 = vld [vmem:[%s3 + $0x78] sm:$0xff]
    %v122 = vld [vmem:[%s4] sm:$0x1]
    %v124 = vlaneseq
    %v125 = vshrl.u32 %v124, 7
    %v126 = vsub.s32 0, %v125
    %v127 = vrot.slane %v122, %v126
    %129 = vmatprep.subr.mxu0 0.0
    %130 = vmatpush1.msra.mxu0 %v106
    %131 = vmatprep.subr.mxu0 0.0
    %132 = vmatpush1.msra.mxu0 %v107
    %133 = vmatprep.subr.mxu0 0.0
    %134 = vmatpush1.msra.mxu0 %v108
    %135 = vmatprep.subr.mxu0 0.0
    %136 = vmatpush1.msra.mxu0 %v109
    %137 = vmatprep.subr.mxu0 0.0
    %138 = vmatpush1.msra.mxu0 %v110
    %139 = vmatprep.subr.mxu0 0.0
    %140 = vmatpush1.msra.mxu0 %v111
    %141 = vmatprep.subr.mxu0 0.0
    %142 = vmatpush1.msra.mxu0 %v112
    %143 = vmatprep.subr.mxu0 0.0
    %144 = vmatpush1.msra.mxu0 %v113
    %145 = vmatprep.subr.mxu0 0.0
    %146 = vmatpush1.msra.mxu0 %v114
    %147 = vmatprep.subr.mxu0 0.0
    %148 = vmatpush1.msra.mxu0 %v115
    %149 = vmatprep.subr.mxu0 0.0
    %150 = vmatpush1.msra.mxu0 %v116
    %151 = vmatprep.subr.mxu0 0.0
    %152 = vmatpush1.msra.mxu0 %v117
    %153 = vmatprep.subr.mxu0 0.0
    %154 = vmatpush1.msra.mxu0 %v118
    %155 = vmatprep.subr.mxu0 0.0
    %156 = vmatpush1.msra.mxu0 %v119
    %157 = vmatprep.subr.mxu0 0.0
    %158 = vmatpush1.msra.mxu0 %v120
    %159 = vmatprep.subr.mxu0 0.0
    %160 = vmatpush1.msra.mxu0 %v121
    %161 = vmatprep.subr.mxu0 0.0
    %162 = vmatpush1.msra.mxu0 0.0
    %163 = vmatprep.subr.mxu0 0.0
    %164 = vmatpush1.msra.mxu0 0.0
    %165 = vmatprep.subr.mxu0 0.0
    %166 = vmatpush1.msra.mxu0 0.0
    %167 = vmatprep.subr.mxu0 0.0
    %168 = vmatpush1.msra.mxu0 0.0
    %169 = vmatprep.subr.mxu0 0.0
    %170 = vmatpush1.msra.mxu0 0.0
    %171 = vmatprep.subr.mxu0 0.0
    %172 = vmatpush1.msra.mxu0 0.0
    %173 = vmatprep.subr.mxu0 0.0
    %174 = vmatpush1.msra.mxu0 0.0
    %175 = vmatprep.subr.mxu0 0.0
    %176 = vmatpush1.msra.mxu0 0.0
    %177 = vmatprep.subr.mxu0 0.0
    %178 = vmatpush1.msra.mxu0 0.0
    %179 = vmatprep.subr.mxu0 0.0
    %180 = vmatpush1.msra.mxu0 0.0
    %181 = vmatprep.subr.mxu0 0.0
    %182 = vmatpush1.msra.mxu0 0.0
    %183 = vmatprep.subr.mxu0 0.0
    %184 = vmatpush1.msra.mxu0 0.0
    %185 = vmatprep.subr.mxu0 0.0
    %186 = vmatpush1.msra.mxu0 0.0
    %187 = vmatprep.subr.mxu0 0.0
    %188 = vmatpush1.msra.mxu0 0.0
    %189 = vmatprep.subr.mxu0 0.0
    %190 = vmatpush1.msra.mxu0 0.0
    %191 = vmatprep.subr.mxu0 0.0
    %192 = vmatpush1.msra.mxu0 0.0
    %193 = vmatprep.mubr.f32.mxu0 0.0
    %194 = vmatmul.mubr.f32.gmra.mrb[0].mxu0 %v105
    %v195 = vpop.f32.mrb[0].mxu0
    %v196 = vadd.f32 %v127, %v195
    %v197 = vpop.f32.mrb[0].mxu0
    %198 = vdwg.mxu0
    %199 = vst.msk [vmem:[#allocation2] sm:$0xff] %vm31, %v196
    // Predicated region
    $region22: #{tpu_custom_call.1} parent=1 // pred_check
      _
    $region23: #{tpu_custom_call.1} parent=1 // pred_check_branch
      %201 = sbr.rel (0) target = $region25
    $region24: #{tpu_custom_call.1} parent=1 // pred_region
      %s203 = ssub.s32 128, 128
      %204 = vsyncadd [#allocation3], %s203
      %s206 = sshll.u32 [#allocation2], 4
      %s207 = int_to_ptr.vmem [resolvable:$true] %s206
      %209 = dma.vmem_to_hbm [thread:$0]  %s207, 128, %s5, [#allocation3]
    $region25: #{tpu_custom_call.1} parent=1 // pred_fallthru
      _
    // Predicated region
    $region26: #{tpu_custom_call.1} parent=1 // pred_check
      _
    $region27: #{tpu_custom_call.1} parent=1 // pred_check_branch
      %211 = sbr.rel (0) target = $region29
    $region28: #{tpu_custom_call.1} parent=1 // pred_region
      %212 = dma.done [#allocation3], 128
    $region29: #{tpu_custom_call.1} parent=1 // pred_fallthru
      _
    %213 = vsyncpa [#allocation3], 1

</llo_original>
